<compile_context>
chip_gen: v7x
topology: tpu7x:2x2x1
jax: 0.10.0
libtpu: 0.0.40
codegen_flags: <defaults>
</compile_context>

<pallas_src>
import functools

import jax
import jax.numpy as jnp
import numpy as np
from jax.experimental import pallas as pl
from jax.experimental.pallas import tpu as pltpu


def _silu(z):
    # z * sigmoid(z); exp lands on the EUP, divide stays exact to hold the
    # 1e-4 reference tolerance (pl.reciprocal(approx=True) buys nothing at
    # this overhead-bound size).
    return z * (1.0 / (1.0 + jnp.exp(-z)))


# ---------------------------------------------------------------------------
# Fused kernel: depthwise conv + BN1 + SiLU  ->  VMEM intermediate  ->
#               1x1 conv (MXU matmul) + bias/BN2 + SiLU  ->  lane-dense output.
#
# The padded spatial plane is flattened onto the lane axis.  For output
# position r = ho*Wp + wo (wo < Wo valid, wo >= Wo discarded padding columns),
# tap (kh, kw) reads flat index kh*Wp + kw + stride*r, a static (strided)
# lane slice — no gathers, no in-kernel reshapes.
# ---------------------------------------------------------------------------
def _make_fused_kernel(Cin, Cout, KH, KW, Wp, Lp, stride):
    mult = Cout // Cin

    def kernel(wdw_ref, sh1_ref, wpw_ref, sh2_ref, x_ref, o_ref, inter_ref):
        # ---- Stage 1: depthwise conv (+ folded BN1) + SiLU ----------------
        # Vectorized over Cin sublanes; taps sliced once (tap-outer loop) and
        # shared by all `mult` multipliers, so only one (Cin, Lp) patch tile
        # is live at a time.
        xb = x_ref[0]                                            # (Cin, Lin)
        accs = [None] * mult
        k = 0
        for kh in range(KH):
            for kw in range(KW):
                off = kh * Wp + kw
                # TODO(synk): for stride==2 production layers, deinterleave
                # even/odd columns once per tile instead of strided slices
                # per tap (keeps the XLU off the critical path).
                patch = jax.lax.slice(
                    xb, (0, off), (Cin, off + stride * (Lp - 1) + 1),
                    (1, stride))                                 # (Cin, Lp)
                for m in range(mult):
                    w_col = wdw_ref[m * Cin:(m + 1) * Cin, k:k + 1]  # (Cin,1)
                    term = w_col * patch
                    accs[m] = term if k == 0 else accs[m] + term
                k += 1

        # m-major intermediate (row r = m*Cin + ci holds original channel
        # co = ci*mult + m); whole (Cin, Lp) block writes per multiplier.
        for m in range(mult):
            z = accs[m] + sh1_ref[m * Cin:(m + 1) * Cin, :]      # BN1 shift
            inter_ref[m * Cin:(m + 1) * Cin, :] = _silu(z)

        # ---- Stage 2: 1x1 conv (+ folded bias/BN2) as one MXU matmul ------
        # TODO(synk): at realistic channel counts cast operands to bf16 with
        # preferred_element_type=f32 (v6e/v7x MXU is bf16-native); at Cout=8
        # the matmul is fill/drain latency only.
        y = jnp.dot(wpw_ref[...], inter_ref[...],
                    preferred_element_type=jnp.float32)          # (Cout, Lp)
        o_ref[0] = _silu(y + sh2_ref[...])                       # unmasked store

    return kernel


# ---------------------------------------------------------------------------
# Wrapper: fold BN params, permute channels m-major, flatten the padded plane
# onto lanes (lane-aligned), call the fused kernel once per batch element.
# ---------------------------------------------------------------------------
@functools.partial(jax.jit, static_argnames=("stride", "padding"))
def conv_bn_act_forward(x, params, *, stride=1, padding=1):
    eps = 1e-5
    N, Cin, H, W = x.shape
    Cout, KH, KW = params["dw_w"].shape
    mult = Cout // Cin
    Hp, Wp = H + 2 * padding, W + 2 * padding
    Ho = (Hp - KH) // stride + 1
    Wo = (Wp - KW) // stride + 1
    L = Ho * Wp                                   # valid flattened length
    Lp = ((L + 127) // 128) * 128                 # lane-aligned working length
    need = (KH - 1) * Wp + (KW - 1) + stride * (Lp - 1) + 1
    Lin = ((max(need, Hp * Wp) + 127) // 128) * 128

    # Fold BN1 into the depthwise taps; BN2 + the 1x1 bias into weight/shift.
    scale1 = params["bn1_gamma"] / jnp.sqrt(params["bn1_var"] + eps)
    shift1 = params["bn1_beta"] - params["bn1_mean"] * scale1
    w_dw_s = (params["dw_w"] * scale1[:, None, None]).reshape(Cout, KH * KW)

    scale2 = params["bn2_gamma"] / jnp.sqrt(params["bn2_var"] + eps)
    shift2 = params["bn2_beta"] + (params["pw_b"] - params["bn2_mean"]) * scale2
    w_pw_s = params["pw_w"] * scale2[:, None]

    # m-major channel permutation (row r = m*Cin + ci <- original ci*mult + m);
    # permuting the 1x1 weight columns keeps the output channel order.
    perm = jnp.arange(Cout).reshape(Cin, mult).T.reshape(-1)
    w_dw_p = w_dw_s[perm]
    sh1_p = shift1[perm].reshape(Cout, 1)
    w_pw_p = w_pw_s[:, perm]
    sh2 = shift2.reshape(Cout, 1)

    # Zero-pad spatially, flatten the padded plane onto lanes, pad the lane
    # axis so every in-kernel tap slice stays in bounds.
    # TODO(synk): at production feature-map sizes handle the pad/halo inside
    # the kernel and tile the flattened spatial axis instead of materialising
    # the padded copy in HBM.
    x_pad = jnp.pad(x, ((0, 0), (0, 0), (padding, padding), (padding, padding)))
    x_flat = x_pad.reshape(N, Cin, Hp * Wp)
    x_flat = jnp.pad(x_flat, ((0, 0), (0, 0), (0, Lin - Hp * Wp)))

    out_flat = pl.pallas_call(
        _make_fused_kernel(Cin, Cout, KH, KW, Wp, Lp, stride),
        out_shape=jax.ShapeDtypeStruct((N, Cout, Lp), jnp.float32),
        grid=(N,),
        in_specs=[
            pl.BlockSpec((Cout, KH * KW), lambda n: (0, 0)),    # depthwise taps (VMEM)
            pl.BlockSpec((Cout, 1), lambda n: (0, 0)),          # BN1 shift
            pl.BlockSpec((Cout, Cout), lambda n: (0, 0)),       # 1x1 weight (folded BN2)
            pl.BlockSpec((Cout, 1), lambda n: (0, 0)),          # BN2 shift (+1x1 bias)
            pl.BlockSpec((1, Cin, Lin), lambda n: (n, 0, 0)),   # input plane (flattened)
        ],
        out_specs=pl.BlockSpec((1, Cout, Lp), lambda n: (n, 0, 0)),
        scratch_shapes=[pltpu.VMEM((Cout, Lp), jnp.float32)],   # fused intermediate
        compiler_params=pltpu.CompilerParams(
            dimension_semantics=("parallel",)),                 # one step/core on v7x
    )(w_dw_p, sh1_p, w_pw_p, sh2, x_flat)

    # Drop the lane padding and the Wp-Wo padded columns (metadata + slice).
    return out_flat[:, :, :L].reshape(N, Cout, Ho, Wp)[:, :, :, :Wo]


# ---------------------------------------------------------------------------
# Pure-JAX reference (same math, via lax.conv) for a correctness check.
# ---------------------------------------------------------------------------
def reference_forward(x, params, *, stride=1, padding=1):
    eps = 1e-5
    dn = ("NCHW", "OIHW", "NCHW")
    Cin = x.shape[1]

    def silu(v):
        return v * jax.nn.sigmoid(v)

    w1 = params["dw_w"][:, None, :, :]                     # (Cout, 1, KH, KW)
    y = jax.lax.conv_general_dilated(
        x, w1, (stride, stride), [(padding, padding), (padding, padding)],
        dimension_numbers=dn, feature_group_count=Cin)
    s1 = params["bn1_gamma"] / jnp.sqrt(params["bn1_var"] + eps)
    y = y * s1[None, :, None, None] + (params["bn1_beta"] - params["bn1_mean"] * s1)[None, :, None, None]
    y = silu(y)

    w2 = params["pw_w"][:, :, None, None]                  # (Cout, Cout, 1, 1)
    y = jax.lax.conv_general_dilated(y, w2, (1, 1), [(0, 0), (0, 0)],
                                     dimension_numbers=dn)
    y = y + params["pw_b"][None, :, None, None]
    s2 = params["bn2_gamma"] / jnp.sqrt(params["bn2_var"] + eps)
    y = y * s2[None, :, None, None] + (params["bn2_beta"] - params["bn2_mean"] * s2)[None, :, None, None]
    return silu(y)


if __name__ == "__main__":
    # Module config: in=4, out=8, k=3, stride=1, padding=1, bias=True, silu, groups=None
    N, Cin, H, W = 2, 4, 16, 16
    Cout, KH, KW = 8, 3, 3
    stride, padding = 1, 1

    key = jax.random.PRNGKey(0)
    ks = jax.random.split(key, 12)
    params = {
        # depthwise conv weight (Conv2d(4, 8, 3, groups=4, bias=False)), squeezed
        "dw_w": 0.2 * jax.random.normal(ks[0], (Cout, KH, KW), jnp.float32),
        "bn1_gamma": 1.0 + 0.1 * jax.random.normal(ks[1], (Cout,), jnp.float32),
        "bn1_beta": 0.1 * jax.random.normal(ks[2], (Cout,), jnp.float32),
        "bn1_mean": 0.1 * jax.random.normal(ks[3], (Cout,), jnp.float32),
        "bn1_var": 0.5 + jnp.abs(jax.random.normal(ks[4], (Cout,), jnp.float32)),
        # pointwise conv weight/bias (Conv2d(8, 8, 1, bias=True)), squeezed
        "pw_w": 0.2 * jax.random.normal(ks[5], (Cout, Cout), jnp.float32),
        "pw_b": 0.1 * jax.random.normal(ks[6], (Cout,), jnp.float32),
        "bn2_gamma": 1.0 + 0.1 * jax.random.normal(ks[7], (Cout,), jnp.float32),
        "bn2_beta": 0.1 * jax.random.normal(ks[8], (Cout,), jnp.float32),
        "bn2_mean": 0.1 * jax.random.normal(ks[9], (Cout,), jnp.float32),
        "bn2_var": 0.5 + jnp.abs(jax.random.normal(ks[10], (Cout,), jnp.float32)),
    }

    x = jax.random.normal(ks[11], (N, Cin, H, W), jnp.float32)

    out = conv_bn_act_forward(x, params, stride=stride, padding=padding)
    out = jax.block_until_ready(out)

    ref = reference_forward(x, params, stride=stride, padding=padding)
    np.testing.assert_allclose(np.asarray(out), np.asarray(ref), rtol=1e-4, atol=1e-4)
    assert out.shape == (N, Cout, H, W) and out.dtype == jnp.float32

    print("KERNEL_OK")
</pallas_src>

<mosaic_0001>
module attributes {stable_mosaic.version = 11 : i64} {
  func.func @kernel(%arg0: i32, %arg1: memref<8x9xf32, #tpu.memory_space<vmem>>, %arg2: memref<8x1xf32, #tpu.memory_space<vmem>>, %arg3: memref<8x8xf32, #tpu.memory_space<vmem>>, %arg4: memref<8x1xf32, #tpu.memory_space<vmem>>, %arg5: memref<1x4x512xf32, #tpu.memory_space<vmem>>, %arg6: memref<1x8x384xf32, #tpu.memory_space<vmem>>, %arg7: memref<8x384xf32, #tpu.memory_space<vmem>>) attributes {dimension_semantics = [#tpu.dimension_semantics<parallel>], iteration_bounds = array<i64: 2>, scalar_prefetch = 0 : i64, scratch_operands = 1 : i64, tpu.core_type = #tpu.core_type<tc>, window_params = [{pipeline_mode = #tpu.pipeline_mode<synchronous>, transform_indices = @transform_0, window_bounds = array<i64: 8, 9>}, {pipeline_mode = #tpu.pipeline_mode<synchronous>, transform_indices = @transform_1, window_bounds = array<i64: 8, 1>}, {pipeline_mode = #tpu.pipeline_mode<synchronous>, transform_indices = @transform_2, window_bounds = array<i64: 8, 8>}, {pipeline_mode = #tpu.pipeline_mode<synchronous>, transform_indices = @transform_3, window_bounds = array<i64: 8, 1>}, {transform_indices = @transform_4, window_bounds = array<i64: 1, 4, 512>}, {transform_indices = @transform_5, window_bounds = array<i64: 1, 8, 384>}]} {
    %c0 = arith.constant 0 : index
    %c0_0 = arith.constant 0 : index
    %c0_1 = arith.constant 0 : index
    %0 = vector.load %arg5[%c0, %c0_0, %c0_1] : memref<1x4x512xf32, #tpu.memory_space<vmem>>, vector<1x4x512xf32>
    %1 = vector.shape_cast %0 : vector<1x4x512xf32> to vector<4x512xf32>
    %2 = vector.extract_strided_slice %1 {offsets = [0, 0], sizes = [4, 384], strides = [1, 1]} : vector<4x512xf32> to vector<4x384xf32>
    %c0_2 = arith.constant 0 : index
    %c0_3 = arith.constant 0 : index
    %3 = vector.load %arg1[%c0_2, %c0_3] : memref<8x9xf32, #tpu.memory_space<vmem>>, vector<4x1xf32>
    %4 = vector.broadcast %3 : vector<4x1xf32> to vector<4x384xf32>
    %5 = arith.mulf %4, %2 : vector<4x384xf32>
    %c4 = arith.constant 4 : index
    %c0_4 = arith.constant 0 : index
    %6 = vector.load %arg1[%c4, %c0_4] : memref<8x9xf32, #tpu.memory_space<vmem>>, vector<4x1xf32>
    %7 = vector.broadcast %6 : vector<4x1xf32> to vector<4x384xf32>
    %8 = arith.mulf %7, %2 : vector<4x384xf32>
    %9 = vector.extract_strided_slice %1 {offsets = [0, 1], sizes = [4, 384], strides = [1, 1]} : vector<4x512xf32> to vector<4x384xf32>
    %c0_5 = arith.constant 0 : index
    %c1 = arith.constant 1 : index
    %10 = vector.load %arg1[%c0_5, %c1] : memref<8x9xf32, #tpu.memory_space<vmem>>, vector<4x1xf32>
    %11 = vector.broadcast %10 : vector<4x1xf32> to vector<4x384xf32>
    %12 = arith.mulf %11, %9 : vector<4x384xf32>
    %13 = arith.addf %5, %12 : vector<4x384xf32>
    %c4_6 = arith.constant 4 : index
    %c1_7 = arith.constant 1 : index
    %14 = vector.load %arg1[%c4_6, %c1_7] : memref<8x9xf32, #tpu.memory_space<vmem>>, vector<4x1xf32>
    %15 = vector.broadcast %14 : vector<4x1xf32> to vector<4x384xf32>
    %16 = arith.mulf %15, %9 : vector<4x384xf32>
    %17 = arith.addf %8, %16 : vector<4x384xf32>
    %18 = vector.extract_strided_slice %1 {offsets = [0, 2], sizes = [4, 384], strides = [1, 1]} : vector<4x512xf32> to vector<4x384xf32>
    %c0_8 = arith.constant 0 : index
    %c2 = arith.constant 2 : index
    %19 = vector.load %arg1[%c0_8, %c2] : memref<8x9xf32, #tpu.memory_space<vmem>>, vector<4x1xf32>
    %20 = vector.broadcast %19 : vector<4x1xf32> to vector<4x384xf32>
    %21 = arith.mulf %20, %18 : vector<4x384xf32>
    %22 = arith.addf %13, %21 : vector<4x384xf32>
    %c4_9 = arith.constant 4 : index
    %c2_10 = arith.constant 2 : index
    %23 = vector.load %arg1[%c4_9, %c2_10] : memref<8x9xf32, #tpu.memory_space<vmem>>, vector<4x1xf32>
    %24 = vector.broadcast %23 : vector<4x1xf32> to vector<4x384xf32>
    %25 = arith.mulf %24, %18 : vector<4x384xf32>
    %26 = arith.addf %17, %25 : vector<4x384xf32>
    %27 = vector.extract_strided_slice %1 {offsets = [0, 18], sizes = [4, 384], strides = [1, 1]} : vector<4x512xf32> to vector<4x384xf32>
    %c0_11 = arith.constant 0 : index
    %c3 = arith.constant 3 : index
    %28 = vector.load %arg1[%c0_11, %c3] : memref<8x9xf32, #tpu.memory_space<vmem>>, vector<4x1xf32>
    %29 = vector.broadcast %28 : vector<4x1xf32> to vector<4x384xf32>
    %30 = arith.mulf %29, %27 : vector<4x384xf32>
    %31 = arith.addf %22, %30 : vector<4x384xf32>
    %c4_12 = arith.constant 4 : index
    %c3_13 = arith.constant 3 : index
    %32 = vector.load %arg1[%c4_12, %c3_13] : memref<8x9xf32, #tpu.memory_space<vmem>>, vector<4x1xf32>
    %33 = vector.broadcast %32 : vector<4x1xf32> to vector<4x384xf32>
    %34 = arith.mulf %33, %27 : vector<4x384xf32>
    %35 = arith.addf %26, %34 : vector<4x384xf32>
    %36 = vector.extract_strided_slice %1 {offsets = [0, 19], sizes = [4, 384], strides = [1, 1]} : vector<4x512xf32> to vector<4x384xf32>
    %c0_14 = arith.constant 0 : index
    %c4_15 = arith.constant 4 : index
    %37 = vector.load %arg1[%c0_14, %c4_15] : memref<8x9xf32, #tpu.memory_space<vmem>>, vector<4x1xf32>
    %38 = vector.broadcast %37 : vector<4x1xf32> to vector<4x384xf32>
    %39 = arith.mulf %38, %36 : vector<4x384xf32>
    %40 = arith.addf %31, %39 : vector<4x384xf32>
    %c4_16 = arith.constant 4 : index
    %c4_17 = arith.constant 4 : index
    %41 = vector.load %arg1[%c4_16, %c4_17] : memref<8x9xf32, #tpu.memory_space<vmem>>, vector<4x1xf32>
    %42 = vector.broadcast %41 : vector<4x1xf32> to vector<4x384xf32>
    %43 = arith.mulf %42, %36 : vector<4x384xf32>
    %44 = arith.addf %35, %43 : vector<4x384xf32>
    %45 = vector.extract_strided_slice %1 {offsets = [0, 20], sizes = [4, 384], strides = [1, 1]} : vector<4x512xf32> to vector<4x384xf32>
    %c0_18 = arith.constant 0 : index
    %c5 = arith.constant 5 : index
    %46 = vector.load %arg1[%c0_18, %c5] : memref<8x9xf32, #tpu.memory_space<vmem>>, vector<4x1xf32>
    %47 = vector.broadcast %46 : vector<4x1xf32> to vector<4x384xf32>
    %48 = arith.mulf %47, %45 : vector<4x384xf32>
    %49 = arith.addf %40, %48 : vector<4x384xf32>
    %c4_19 = arith.constant 4 : index
    %c5_20 = arith.constant 5 : index
    %50 = vector.load %arg1[%c4_19, %c5_20] : memref<8x9xf32, #tpu.memory_space<vmem>>, vector<4x1xf32>
    %51 = vector.broadcast %50 : vector<4x1xf32> to vector<4x384xf32>
    %52 = arith.mulf %51, %45 : vector<4x384xf32>
    %53 = arith.addf %44, %52 : vector<4x384xf32>
    %54 = vector.extract_strided_slice %1 {offsets = [0, 36], sizes = [4, 384], strides = [1, 1]} : vector<4x512xf32> to vector<4x384xf32>
    %c0_21 = arith.constant 0 : index
    %c6 = arith.constant 6 : index
    %55 = vector.load %arg1[%c0_21, %c6] : memref<8x9xf32, #tpu.memory_space<vmem>>, vector<4x1xf32>
    %56 = vector.broadcast %55 : vector<4x1xf32> to vector<4x384xf32>
    %57 = arith.mulf %56, %54 : vector<4x384xf32>
    %58 = arith.addf %49, %57 : vector<4x384xf32>
    %c4_22 = arith.constant 4 : index
    %c6_23 = arith.constant 6 : index
    %59 = vector.load %arg1[%c4_22, %c6_23] : memref<8x9xf32, #tpu.memory_space<vmem>>, vector<4x1xf32>
    %60 = vector.broadcast %59 : vector<4x1xf32> to vector<4x384xf32>
    %61 = arith.mulf %60, %54 : vector<4x384xf32>
    %62 = arith.addf %53, %61 : vector<4x384xf32>
    %63 = vector.extract_strided_slice %1 {offsets = [0, 37], sizes = [4, 384], strides = [1, 1]} : vector<4x512xf32> to vector<4x384xf32>
    %c0_24 = arith.constant 0 : index
    %c7 = arith.constant 7 : index
    %64 = vector.load %arg1[%c0_24, %c7] : memref<8x9xf32, #tpu.memory_space<vmem>>, vector<4x1xf32>
    %65 = vector.broadcast %64 : vector<4x1xf32> to vector<4x384xf32>
    %66 = arith.mulf %65, %63 : vector<4x384xf32>
    %67 = arith.addf %58, %66 : vector<4x384xf32>
    %c4_25 = arith.constant 4 : index
    %c7_26 = arith.constant 7 : index
    %68 = vector.load %arg1[%c4_25, %c7_26] : memref<8x9xf32, #tpu.memory_space<vmem>>, vector<4x1xf32>
    %69 = vector.broadcast %68 : vector<4x1xf32> to vector<4x384xf32>
    %70 = arith.mulf %69, %63 : vector<4x384xf32>
    %71 = arith.addf %62, %70 : vector<4x384xf32>
    %72 = vector.extract_strided_slice %1 {offsets = [0, 38], sizes = [4, 384], strides = [1, 1]} : vector<4x512xf32> to vector<4x384xf32>
    %c0_27 = arith.constant 0 : index
    %c8 = arith.constant 8 : index
    %73 = vector.load %arg1[%c0_27, %c8] : memref<8x9xf32, #tpu.memory_space<vmem>>, vector<4x1xf32>
    %74 = vector.broadcast %73 : vector<4x1xf32> to vector<4x384xf32>
    %75 = arith.mulf %74, %72 : vector<4x384xf32>
    %76 = arith.addf %67, %75 : vector<4x384xf32>
    %c4_28 = arith.constant 4 : index
    %c8_29 = arith.constant 8 : index
    %77 = vector.load %arg1[%c4_28, %c8_29] : memref<8x9xf32, #tpu.memory_space<vmem>>, vector<4x1xf32>
    %78 = vector.broadcast %77 : vector<4x1xf32> to vector<4x384xf32>
    %79 = arith.mulf %78, %72 : vector<4x384xf32>
    %80 = arith.addf %71, %79 : vector<4x384xf32>
    %c0_30 = arith.constant 0 : index
    %c0_31 = arith.constant 0 : index
    %81 = vector.load %arg2[%c0_30, %c0_31] : memref<8x1xf32, #tpu.memory_space<vmem>>, vector<4x1xf32>
    %82 = vector.broadcast %81 : vector<4x1xf32> to vector<4x384xf32>
    %83 = arith.addf %76, %82 : vector<4x384xf32>
    %cst = arith.constant 0.000000e+00 : f32
    %84 = vector.broadcast %cst : f32 to vector<4x384xf32>
    %85 = arith.subf %84, %83 : vector<4x384xf32>
    %86 = math.exp %85 : vector<4x384xf32>
    %cst_32 = arith.constant 1.000000e+00 : f32
    %87 = vector.broadcast %cst_32 : f32 to vector<4x384xf32>
    %88 = arith.addf %87, %86 : vector<4x384xf32>
    %cst_33 = arith.constant 1.000000e+00 : f32
    %89 = vector.broadcast %cst_33 : f32 to vector<4x384xf32>
    %90 = arith.divf %89, %88 : vector<4x384xf32>
    %91 = arith.mulf %83, %90 : vector<4x384xf32>
    %c0_34 = arith.constant 0 : index
    %c0_35 = arith.constant 0 : index
    %92 = vector.load %arg7[%c0_34, %c0_35] : memref<8x384xf32, #tpu.memory_space<vmem>>, vector<4x384xf32>
    tpu.vector_store %arg7[%c0_34, %c0_35], %91 {strides = array<i32>} : memref<8x384xf32, #tpu.memory_space<vmem>>, vector<4x384xf32>,
    %c4_36 = arith.constant 4 : index
    %c0_37 = arith.constant 0 : index
    %93 = vector.load %arg2[%c4_36, %c0_37] : memref<8x1xf32, #tpu.memory_space<vmem>>, vector<4x1xf32>
    %94 = vector.broadcast %93 : vector<4x1xf32> to vector<4x384xf32>
    %95 = arith.addf %80, %94 : vector<4x384xf32>
    %cst_38 = arith.constant 0.000000e+00 : f32
    %96 = vector.broadcast %cst_38 : f32 to vector<4x384xf32>
    %97 = arith.subf %96, %95 : vector<4x384xf32>
    %98 = math.exp %97 : vector<4x384xf32>
    %cst_39 = arith.constant 1.000000e+00 : f32
    %99 = vector.broadcast %cst_39 : f32 to vector<4x384xf32>
    %100 = arith.addf %99, %98 : vector<4x384xf32>
    %cst_40 = arith.constant 1.000000e+00 : f32
    %101 = vector.broadcast %cst_40 : f32 to vector<4x384xf32>
    %102 = arith.divf %101, %100 : vector<4x384xf32>
    %103 = arith.mulf %95, %102 : vector<4x384xf32>
    %c4_41 = arith.constant 4 : index
    %c0_42 = arith.constant 0 : index
    %104 = vector.load %arg7[%c4_41, %c0_42] : memref<8x384xf32, #tpu.memory_space<vmem>>, vector<4x384xf32>
    tpu.vector_store %arg7[%c4_41, %c0_42], %103 {strides = array<i32>} : memref<8x384xf32, #tpu.memory_space<vmem>>, vector<4x384xf32>,
    %c0_43 = arith.constant 0 : index
    %c0_44 = arith.constant 0 : index
    %105 = vector.load %arg3[%c0_43, %c0_44] : memref<8x8xf32, #tpu.memory_space<vmem>>, vector<8x8xf32>
    %c0_45 = arith.constant 0 : index
    %c0_46 = arith.constant 0 : index
    %106 = vector.load %arg7[%c0_45, %c0_46] : memref<8x384xf32, #tpu.memory_space<vmem>>, vector<8x384xf32>
    %cst_47 = arith.constant dense<0.000000e+00> : vector<8x384xf32>
    %107 = tpu.matmul %105, %106, %cst_47 {dimension_numbers = #tpu.dot_dimension_numbers<[1], [0], [0], [1], [0, 0, 1, 1], [], []>} : vector<8x8xf32>, vector<8x384xf32>, vector<8x384xf32> -> vector<8x384xf32>
    %c0_48 = arith.constant 0 : index
    %c0_49 = arith.constant 0 : index
    %108 = vector.load %arg4[%c0_48, %c0_49] : memref<8x1xf32, #tpu.memory_space<vmem>>, vector<8x1xf32>
    %109 = vector.broadcast %108 : vector<8x1xf32> to vector<8x384xf32>
    %110 = arith.addf %107, %109 : vector<8x384xf32>
    %cst_50 = arith.constant 0.000000e+00 : f32
    %111 = vector.broadcast %cst_50 : f32 to vector<8x384xf32>
    %112 = arith.subf %111, %110 : vector<8x384xf32>
    %113 = math.exp %112 : vector<8x384xf32>
    %cst_51 = arith.constant 1.000000e+00 : f32
    %114 = vector.broadcast %cst_51 : f32 to vector<8x384xf32>
    %115 = arith.addf %114, %113 : vector<8x384xf32>
    %cst_52 = arith.constant 1.000000e+00 : f32
    %116 = vector.broadcast %cst_52 : f32 to vector<8x384xf32>
    %117 = arith.divf %116, %115 : vector<8x384xf32>
    %118 = arith.mulf %110, %117 : vector<8x384xf32>
    %c0_53 = arith.constant 0 : index
    %c0_54 = arith.constant 0 : index
    %c0_55 = arith.constant 0 : index
    %119 = vector.load %arg6[%c0_53, %c0_54, %c0_55] : memref<1x8x384xf32, #tpu.memory_space<vmem>>, vector<1x8x384xf32>
    %120 = vector.shape_cast %119 : vector<1x8x384xf32> to vector<8x384xf32>
    %121 = vector.shape_cast %118 : vector<8x384xf32> to vector<1x8x384xf32>
    tpu.vector_store %arg6[%c0_53, %c0_54, %c0_55], %121 {strides = array<i32>} : memref<1x8x384xf32, #tpu.memory_space<vmem>>, vector<1x8x384xf32>,
    return
  }
  func.func @transform_0(%arg0: i32) -> (i32, i32) {
    %c0_i32 = arith.constant 0 : i32
    %c0_i32_0 = arith.constant 0 : i32
    %c0_i32_1 = arith.constant 0 : i32
    return %c0_i32, %c0_i32_0 : i32, i32
  }
  func.func @transform_1(%arg0: i32) -> (i32, i32) {
    %c0_i32 = arith.constant 0 : i32
    %c0_i32_0 = arith.constant 0 : i32
    %c0_i32_1 = arith.constant 0 : i32
    return %c0_i32, %c0_i32_0 : i32, i32
  }
  func.func @transform_2(%arg0: i32) -> (i32, i32) {
    %c0_i32 = arith.constant 0 : i32
    %c0_i32_0 = arith.constant 0 : i32
    %c0_i32_1 = arith.constant 0 : i32
    return %c0_i32, %c0_i32_0 : i32, i32
  }
  func.func @transform_3(%arg0: i32) -> (i32, i32) {
    %c0_i32 = arith.constant 0 : i32
    %c0_i32_0 = arith.constant 0 : i32
    %c0_i32_1 = arith.constant 0 : i32
    return %c0_i32, %c0_i32_0 : i32, i32
  }
  func.func @transform_4(%arg0: i32) -> (i32, i32, i32) {
    %c0_i32 = arith.constant 0 : i32
    %c0_i32_0 = arith.constant 0 : i32
    %c0_i32_1 = arith.constant 0 : i32
    return %arg0, %c0_i32, %c0_i32_0 : i32, i32, i32
  }
  func.func @transform_5(%arg0: i32) -> (i32, i32, i32) {
    %c0_i32 = arith.constant 0 : i32
    %c0_i32_0 = arith.constant 0 : i32
    %c0_i32_1 = arith.constant 0 : i32
    return %arg0, %c0_i32, %c0_i32_0 : i32, i32, i32
  }
}

</mosaic_0001>

<llo_original>
// kernel: conv_bn_act_forward.1
$region0: #{conv_bn_act_forward.1}
  #allocation0 [shape = 'u32[]', space=smem, size = 0x4, offset = 0x4, fixed_abs, tag = 'smem constant byte address 0x4 - core index']
  #allocation1 [shape = 'u32[144,128]{1,0:T(1,128)}', space=vmem, size = 0x12000, scoped, tag = 'internal scratch']
  #allocation2 [shape = 'f32[8,384]{1,0:T(8,128)}', space=vmem, size = 0x3000, scoped, tag = 'scratch operand']
  %s0 = inlined_call_operand.vmem [shape: f32[8,9], index: 0, kind: input, shape index: {}]
  %s1 = inlined_call_operand.vmem [shape: f32[8,1], index: 1, kind: input, shape index: {}]
  %s2 = inlined_call_operand.vmem [shape: f32[8,8], index: 2, kind: input, shape index: {}]
  %s3 = inlined_call_operand.vmem [shape: f32[8,1], index: 3, kind: input, shape index: {}]
  %s4 = inlined_call_operand.vmem [shape: f32[2,4,512], index: 4, kind: input, shape index: {}]
  %s5 = inlined_call_operand.vmem [shape: f32[2,8,384], index: 5, kind: output, shape index: {}]
  %s6 = sld [smem:[#allocation0]]
  $region53: #{conv_bn_act_forward.1} parent=0
    _
  %s8 = ssub.s32 1, %s6
  %s9 = scalar_select 0, %s8, %s6
  loop: start=0, step=1, limit=4
  $region2: #{conv_bn_act_forward.1} parent=0 // loop_pre_header
    _
  $region3: #{conv_bn_act_forward.1} parent=0 // loop_header
    %s11 = sphi 0, %s15
    %p12 = scmp.ge.s32.totalorder %s11, 4
    %s19 = sphi 0, %s19
    %s21 = sphi 0, %s19
    %s22 = sphi 0, %s21
    %s36 = sphi 0, %s22
    %s40 = sphi 0, %s40
    %s42 = sphi 0, %s40
    %s43 = sphi 0, %s42
    %s57 = sphi 0, %s43
    %s61 = sphi 0, %s61
    %s63 = sphi 0, %s61
    %s64 = sphi 0, %s63
    %s78 = sphi 0, %s64
    %s82 = sphi 0, %s82
    %s84 = sphi 0, %s82
    %s85 = sphi 0, %s84
    %s99 = sphi 0, %s85
    %s105 = sphi 0, %s107
    %s108 = sphi 0, %s105
    %s109 = sphi 0, %s108
    %s125 = sphi 0, %s109
    %s131 = sphi 0, %s133
    %s134 = sphi 0, %s131
    %s135 = sphi 0, %s134
    %s151 = sphi 0, %s135
  $region4: #{conv_bn_act_forward.1} parent=0 // loop_header_branch
    %14 = sbr.rel (%p12) target = $region8
  $region5: #{conv_bn_act_forward.1} parent=0 // loop_body
    %s16 = ssub.s32 %s11, 1
    %s17 = ssub.s32 %s11, 2
    %s18 = sadd.s32 %s11, 1
    %s20 = sadd.s32 %s19, 1
    %p23 = scmp.eq.s32.totalorder %s11, 1
    %p24 = scmp.ne.s32.totalorder %s19, %s21
    %p25 = scmp.eq.s32.totalorder %s11, 0
    %p26 = por %p24, %p25
    %p27 = scmp.ne.s32.totalorder %s19, %s21
    %p28 = scmp.eq.s32.totalorder %s16, 1
    %p29 = por %p27, %p28
    %p30 = scmp.ne.s32.totalorder %s21, %s22
    %p31 = scmp.eq.s32.totalorder %s16, 0
    %p32 = por %p30, %p31
    %p33 = scmp.ne.s32.totalorder %s21, %s22
    %p34 = scmp.eq.s32.totalorder %s17, 1
    %p35 = por %p33, %p34
    %p37 = scmp.ne.s32.totalorder %s22, %s36
    %p38 = scmp.eq.s32.totalorder %s17, 0
    %p39 = por %p37, %p38
    %s41 = sadd.s32 %s40, 1
    %p44 = scmp.eq.s32.totalorder %s11, 1
    %p45 = scmp.ne.s32.totalorder %s40, %s42
    %p46 = scmp.eq.s32.totalorder %s11, 0
    %p47 = por %p45, %p46
    %p48 = scmp.ne.s32.totalorder %s40, %s42
    %p49 = scmp.eq.s32.totalorder %s16, 1
    %p50 = por %p48, %p49
    %p51 = scmp.ne.s32.totalorder %s42, %s43
    %p52 = scmp.eq.s32.totalorder %s16, 0
    %p53 = por %p51, %p52
    %p54 = scmp.ne.s32.totalorder %s42, %s43
    %p55 = scmp.eq.s32.totalorder %s17, 1
    %p56 = por %p54, %p55
    %p58 = scmp.ne.s32.totalorder %s43, %s57
    %p59 = scmp.eq.s32.totalorder %s17, 0
    %p60 = por %p58, %p59
    %s62 = sadd.s32 %s61, 1
    %p65 = scmp.eq.s32.totalorder %s11, 1
    %p66 = scmp.ne.s32.totalorder %s61, %s63
    %p67 = scmp.eq.s32.totalorder %s11, 0
    %p68 = por %p66, %p67
    %p69 = scmp.ne.s32.totalorder %s61, %s63
    %p70 = scmp.eq.s32.totalorder %s16, 1
    %p71 = por %p69, %p70
    %p72 = scmp.ne.s32.totalorder %s63, %s64
    %p73 = scmp.eq.s32.totalorder %s16, 0
    %p74 = por %p72, %p73
    %p75 = scmp.ne.s32.totalorder %s63, %s64
    %p76 = scmp.eq.s32.totalorder %s17, 1
    %p77 = por %p75, %p76
    %p79 = scmp.ne.s32.totalorder %s64, %s78
    %p80 = scmp.eq.s32.totalorder %s17, 0
    %p81 = por %p79, %p80
    %s83 = sadd.s32 %s82, 1
    %p86 = scmp.eq.s32.totalorder %s11, 1
    %p87 = scmp.ne.s32.totalorder %s82, %s84
    %p88 = scmp.eq.s32.totalorder %s11, 0
    %p89 = por %p87, %p88
    %p90 = scmp.ne.s32.totalorder %s82, %s84
    %p91 = scmp.eq.s32.totalorder %s16, 1
    %p92 = por %p90, %p91
    %p93 = scmp.ne.s32.totalorder %s84, %s85
    %p94 = scmp.eq.s32.totalorder %s16, 0
    %p95 = por %p93, %p94
    %p96 = scmp.ne.s32.totalorder %s84, %s85
    %p97 = scmp.eq.s32.totalorder %s17, 1
    %p98 = por %p96, %p97
    %p100 = scmp.ne.s32.totalorder %s85, %s99
    %p101 = scmp.eq.s32.totalorder %s17, 0
    %p102 = por %p100, %p101
    %s103 = ssub.s32 %s11, %s18
    %p104 = scmp.eq.s32.totalorder %s103, 0
    %s106 = sadd.s32 %s105, 1
    %s107 = scalar_select %p104, %s105, %s106
    %p110 = pneg %p104
    %p111 = scmp.eq.s32.totalorder %s11, 1
    %p112 = por %p110, %p111
    %p113 = scmp.ne.s32.totalorder %s105, %s108
    %p114 = scmp.eq.s32.totalorder %s11, 0
    %p115 = por %p113, %p114
    %p116 = scmp.ne.s32.totalorder %s105, %s108
    %p117 = scmp.eq.s32.totalorder %s16, 1
    %p118 = por %p116, %p117
    %p119 = scmp.ne.s32.totalorder %s108, %s109
    %p120 = scmp.eq.s32.totalorder %s16, 0
    %p121 = por %p119, %p120
    %p122 = scmp.ne.s32.totalorder %s108, %s109
    %p123 = scmp.eq.s32.totalorder %s17, 1
    %p124 = por %p122, %p123
    %p126 = scmp.ne.s32.totalorder %s109, %s125
    %p127 = scmp.eq.s32.totalorder %s17, 0
    %p128 = por %p126, %p127
    %s129 = ssub.s32 %s11, %s18
    %p130 = scmp.eq.s32.totalorder %s129, 0
    %s132 = sadd.s32 %s131, 1
    %s133 = scalar_select %p130, %s131, %s132
    %p136 = pneg %p130
    %p137 = scmp.eq.s32.totalorder %s11, 1
    %p138 = por %p136, %p137
    %p139 = scmp.ne.s32.totalorder %s131, %s134
    %p140 = scmp.eq.s32.totalorder %s11, 0
    %p141 = por %p139, %p140
    %p142 = scmp.ne.s32.totalorder %s131, %s134
    %p143 = scmp.eq.s32.totalorder %s16, 1
    %p144 = por %p142, %p143
    %p145 = scmp.ne.s32.totalorder %s134, %s135
    %p146 = scmp.eq.s32.totalorder %s16, 0
    %p147 = por %p145, %p146
    %p148 = scmp.ne.s32.totalorder %s134, %s135
    %p149 = scmp.eq.s32.totalorder %s17, 1
    %p150 = por %p148, %p149
    %p152 = scmp.ne.s32.totalorder %s135, %s151
    %p153 = scmp.eq.s32.totalorder %s17, 0
    %p154 = por %p152, %p153
    %p155 = scmp.le.s32.totalorder 1, %s11
    %p156 = scmp.lt.s32.totalorder %s11, 3
    %p157 = pnand %p155, %p156
    %p158 = pneg %p157
    // Predicated region
    $region9: #{conv_bn_act_forward.1} parent=5 // pred_check
      _
    $region10: #{conv_bn_act_forward.1} parent=5 // pred_check_branch
      %160 = sbr.rel (%p157) target = $region12
    $region11: #{conv_bn_act_forward.1} parent=5 // pred_region
      %s161 = ssub.s32 %s11, 1
      // Predicated region
      $region13: #{conv_bn_act_forward.1} parent=11 // pred_check
        %p162 = pneg %p32
      $region14: #{conv_bn_act_forward.1} parent=11 // pred_check_branch
        %164 = sbr.rel (%p162) target = $region16
      $region15: #{conv_bn_act_forward.1} parent=11 // pred_region
        _
      $region16: #{conv_bn_act_forward.1} parent=11 // pred_fallthru
        _
      // Predicated region
      $region17: #{conv_bn_act_forward.1} parent=11 // pred_check
        %p165 = pneg %p53
      $region18: #{conv_bn_act_forward.1} parent=11 // pred_check_branch
        %167 = sbr.rel (%p165) target = $region20
      $region19: #{conv_bn_act_forward.1} parent=11 // pred_region
        _
      $region20: #{conv_bn_act_forward.1} parent=11 // pred_fallthru
        _
      // Predicated region
      $region21: #{conv_bn_act_forward.1} parent=11 // pred_check
        %p168 = pneg %p74
      $region22: #{conv_bn_act_forward.1} parent=11 // pred_check_branch
        %170 = sbr.rel (%p168) target = $region24
      $region23: #{conv_bn_act_forward.1} parent=11 // pred_region
        _
      $region24: #{conv_bn_act_forward.1} parent=11 // pred_fallthru
        _
      // Predicated region
      $region25: #{conv_bn_act_forward.1} parent=11 // pred_check
        %p171 = pneg %p95
      $region26: #{conv_bn_act_forward.1} parent=11 // pred_check_branch
        %173 = sbr.rel (%p171) target = $region28
      $region27: #{conv_bn_act_forward.1} parent=11 // pred_region
        _
      $region28: #{conv_bn_act_forward.1} parent=11 // pred_fallthru
        _
    $region12: #{conv_bn_act_forward.1} parent=5 // pred_fallthru
      _
    %p174 = scmp.lt.s32.totalorder %s11, 2
    // Predicated region
    $region29: #{conv_bn_act_forward.1} parent=5 // pred_check
      %p175 = pneg %p174
    $region30: #{conv_bn_act_forward.1} parent=5 // pred_check_branch
      %177 = sbr.rel (%p175) target = $region32
    $region31: #{conv_bn_act_forward.1} parent=5 // pred_region
      // Predicated region
      $region33: #{conv_bn_act_forward.1} parent=31 // pred_check
        %p178 = pneg %p115
      $region34: #{conv_bn_act_forward.1} parent=31 // pred_check_branch
        %180 = sbr.rel (%p178) target = $region36
      $region35: #{conv_bn_act_forward.1} parent=31 // pred_region
        %p181 = scmp.lt.s32.totalorder %s11, 1
        %s182 = scalar_select %p181, %s11, 1
        %s183 = smul.addr %s182, 4
        %s184 = smul.addr %s183, 4
        %s185 = scalar_lea.vmem %s4, %s184
      $region36: #{conv_bn_act_forward.1} parent=31 // pred_fallthru
        _
    $region32: #{conv_bn_act_forward.1} parent=5 // pred_fallthru
      _
    %p186 = scmp.le.s32.totalorder 1, %s11
    %p187 = scmp.lt.s32.totalorder %s11, 3
    %p188 = pnand %p186, %p187
    %p189 = pneg %p188
    // Predicated region
    $region37: #{conv_bn_act_forward.1} parent=5 // pred_check
      _
    $region38: #{conv_bn_act_forward.1} parent=5 // pred_check_branch
      %191 = sbr.rel (%p188) target = $region40
    $region39: #{conv_bn_act_forward.1} parent=5 // pred_region
      %s192 = ssub.s32 %s11, 1
      %p193 = pneg %p32
      %p194 = pneg %p29
      %p195 = pneg %p53
      %p196 = pneg %p50
      %p197 = pneg %p74
      %p198 = pneg %p71
      %p199 = pneg %p95
      %p200 = pneg %p92
      %p201 = scmp.lt.s32.totalorder %s16, 1
      %s202 = scalar_select %p201, %s16, 1
      %s203 = smul.addr %s202, 4
      %s204 = smul.addr %s203, 4
      %s205 = scalar_lea.vmem %s4, %s204
      %p206 = pneg %p121
      %p207 = pneg %p118
      %p208 = pneg %p147
      %p209 = pneg %p144
      %p210 = scmp.lt.s32.totalorder %s16, 1
      %s211 = scalar_select %p210, %s16, 1
      %s212 = smul.addr %s211, 3
      %s213 = smul.addr %s212, 8
      %s214 = scalar_lea.vmem %s5, %s213
      %p215 = scmp.lt.s32.totalorder %s16, 1
      %s216 = scalar_select %p215, %s16, 1
      %s217 = smul.addr %s216, 4
      %s218 = smul.addr %s217, 4
      %s219 = scalar_lea.vmem %s4, %s218
      %p220 = scmp.lt.s32.totalorder %s16, 1
      %s221 = scalar_select %p220, %s16, 1
      %s222 = smul.addr %s221, 3
      %s223 = smul.addr %s222, 8
      %s224 = scalar_lea.vmem %s5, %s223
      %v225 = vld [vmem:[%s219] sm:$0xff]
      %v226 = vld [vmem:[%s219 + $0x8] sm:$0xff]
      %v227 = vld [vmem:[%s0] sm:$0xf]
      %229 = vset.pattern.permute.xlu0 0
      %230 = vperm.xlu0 %229, %v227
      %v231 = vpop.permute.xlu0 %230
      %v235 = vcombine.high %v225, %v225
      %v237 = vmul.f32 %v231, %v225
      %v238 = vmul.f32 %v231, %v235
      %v239 = vmul.f32 %v231, %v226
      %v240 = vld [vmem:[%s0 + $0x4] sm:$0xf]
      %242 = vset.pattern.permute.xlu0 0
      %243 = vperm.xlu0 %242, %v240
      %v244 = vpop.permute.xlu0 %243
      %v246 = vmul.f32 %v244, %v225
      %v247 = vmul.f32 %v244, %v235
      %v248 = vmul.f32 %v244, %v226
      %v249 = vld [vmem:[%s0] sm:$0xf]
      %251 = vset.pattern.permute.xlu0 1
      %252 = vperm.xlu0 %251, %v249
      %v253 = vpop.permute.xlu0 %252
      %v255 = vcombine.high %v226, %v226
      %256 = vrot.lane.b32.xlu0 %v225, 127
      %v257 = vpop.permute.xlu0 %256
      %258 = vrot.lane.b32.xlu0 %v235, 127
      %v259 = vpop.permute.xlu0 %258
      %260 = vrot.lane.b32.xlu0 %v226, 127
      %v261 = vpop.permute.xlu0 %260
      %262 = vrot.lane.b32.xlu0 %v255, 127
      %v263 = vpop.permute.xlu0 %262
      %vm264 = vcmask 1039360
      %v265 = vsel %vm264, %v257, %v259
      %v266 = vsel %vm264, %v259, %v261
      %v267 = vsel %vm264, %v261, %v263
      %v271 = vmul.f32 %v253, %v265
      %v272 = vmul.f32 %v253, %v266
      %v273 = vmul.f32 %v253, %v267
      %v274 = vadd.f32 %v237, %v271
      %v275 = vadd.f32 %v238, %v272
      %v276 = vadd.f32 %v239, %v273
      %v277 = vld [vmem:[%s0 + $0x4] sm:$0xf]
      %279 = vset.pattern.permute.xlu0 1
      %280 = vperm.xlu0 %279, %v277
      %v281 = vpop.permute.xlu0 %280
      %v283 = vmul.f32 %v281, %v265
      %v284 = vmul.f32 %v281, %v266
      %v285 = vmul.f32 %v281, %v267
      %v286 = vadd.f32 %v246, %v283
      %v287 = vadd.f32 %v247, %v284
      %v288 = vadd.f32 %v248, %v285
      %v289 = vld [vmem:[%s0] sm:$0xf]
      %291 = vset.pattern.permute.xlu0 2
      %292 = vperm.xlu0 %291, %v289
      %v293 = vpop.permute.xlu0 %292
      %295 = vrot.lane.b32.xlu0 %v225, 126
      %v296 = vpop.permute.xlu0 %295
      %297 = vrot.lane.b32.xlu0 %v235, 126
      %v298 = vpop.permute.xlu0 %297
      %299 = vrot.lane.b32.xlu0 %v226, 126
      %v300 = vpop.permute.xlu0 %299
      %301 = vrot.lane.b32.xlu0 %v255, 126
      %v302 = vpop.permute.xlu0 %301
      %vm303 = vcmask 1031168
      %v304 = vsel %vm303, %v296, %v298
      %v305 = vsel %vm303, %v298, %v300
      %v306 = vsel %vm303, %v300, %v302
      %v310 = vmul.f32 %v293, %v304
      %v311 = vmul.f32 %v293, %v305
      %v312 = vmul.f32 %v293, %v306
      %v313 = vadd.f32 %v274, %v310
      %v314 = vadd.f32 %v275, %v311
      %v315 = vadd.f32 %v276, %v312
      %v316 = vld [vmem:[%s0 + $0x4] sm:$0xf]
      %318 = vset.pattern.permute.xlu0 2
      %319 = vperm.xlu0 %318, %v316
      %v320 = vpop.permute.xlu0 %319
      %v322 = vmul.f32 %v320, %v304
      %v323 = vmul.f32 %v320, %v305
      %v324 = vmul.f32 %v320, %v306
      %v325 = vadd.f32 %v286, %v322
      %v326 = vadd.f32 %v287, %v323
      %v327 = vadd.f32 %v288, %v324
      %v328 = vld [vmem:[%s0] sm:$0xf]
      %330 = vset.pattern.permute.xlu0 3
      %331 = vperm.xlu0 %330, %v328
      %v332 = vpop.permute.xlu0 %331
      %334 = vrot.lane.b32.xlu0 %v225, 110
      %v335 = vpop.permute.xlu0 %334
      %336 = vrot.lane.b32.xlu0 %v235, 110
      %v337 = vpop.permute.xlu0 %336
      %338 = vrot.lane.b32.xlu0 %v226, 110
      %v339 = vpop.permute.xlu0 %338
      %340 = vrot.lane.b32.xlu0 %v255, 110
      %v341 = vpop.permute.xlu0 %340
      %vm342 = vcmask 900096
      %v343 = vsel %vm342, %v335, %v337
      %v344 = vsel %vm342, %v337, %v339
      %v345 = vsel %vm342, %v339, %v341
      %v349 = vmul.f32 %v332, %v343
      %v350 = vmul.f32 %v332, %v344
      %v351 = vmul.f32 %v332, %v345
      %v352 = vadd.f32 %v313, %v349
      %v353 = vadd.f32 %v314, %v350
      %v354 = vadd.f32 %v315, %v351
      %v355 = vld [vmem:[%s0 + $0x4] sm:$0xf]
      %357 = vset.pattern.permute.xlu0 3
      %358 = vperm.xlu0 %357, %v355
      %v359 = vpop.permute.xlu0 %358
      %v361 = vmul.f32 %v359, %v343
      %v362 = vmul.f32 %v359, %v344
      %v363 = vmul.f32 %v359, %v345
      %v364 = vadd.f32 %v325, %v361
      %v365 = vadd.f32 %v326, %v362
      %v366 = vadd.f32 %v327, %v363
      %v367 = vld [vmem:[%s0] sm:$0xf]
      %369 = vset.pattern.permute.xlu0 4
      %370 = vperm.xlu0 %369, %v367
      %v371 = vpop.permute.xlu0 %370
      %373 = vrot.lane.b32.xlu0 %v225, 109
      %v374 = vpop.permute.xlu0 %373
      %375 = vrot.lane.b32.xlu0 %v235, 109
      %v376 = vpop.permute.xlu0 %375
      %377 = vrot.lane.b32.xlu0 %v226, 109
      %v378 = vpop.permute.xlu0 %377
      %379 = vrot.lane.b32.xlu0 %v255, 109
      %v380 = vpop.permute.xlu0 %379
      %vm381 = vcmask 891904
      %v382 = vsel %vm381, %v374, %v376
      %v383 = vsel %vm381, %v376, %v378
      %v384 = vsel %vm381, %v378, %v380
      %v388 = vmul.f32 %v371, %v382
      %v389 = vmul.f32 %v371, %v383
      %v390 = vmul.f32 %v371, %v384
      %v391 = vadd.f32 %v352, %v388
      %v392 = vadd.f32 %v353, %v389
      %v393 = vadd.f32 %v354, %v390
      %v394 = vld [vmem:[%s0 + $0x4] sm:$0xf]
      %396 = vset.pattern.permute.xlu0 4
      %397 = vperm.xlu0 %396, %v394
      %v398 = vpop.permute.xlu0 %397
      %v400 = vmul.f32 %v398, %v382
      %v401 = vmul.f32 %v398, %v383
      %v402 = vmul.f32 %v398, %v384
      %v403 = vadd.f32 %v364, %v400
      %v404 = vadd.f32 %v365, %v401
      %v405 = vadd.f32 %v366, %v402
      %v406 = vld [vmem:[%s0] sm:$0xf]
      %408 = vset.pattern.permute.xlu0 5
      %409 = vperm.xlu0 %408, %v406
      %v410 = vpop.permute.xlu0 %409
      %412 = vrot.lane.b32.xlu0 %v225, 108
      %v413 = vpop.permute.xlu0 %412
      %414 = vrot.lane.b32.xlu0 %v235, 108
      %v415 = vpop.permute.xlu0 %414
      %416 = vrot.lane.b32.xlu0 %v226, 108
      %v417 = vpop.permute.xlu0 %416
      %418 = vrot.lane.b32.xlu0 %v255, 108
      %v419 = vpop.permute.xlu0 %418
      %vm420 = vcmask 883712
      %v421 = vsel %vm420, %v413, %v415
      %v422 = vsel %vm420, %v415, %v417
      %v423 = vsel %vm420, %v417, %v419
      %v427 = vmul.f32 %v410, %v421
      %v428 = vmul.f32 %v410, %v422
      %v429 = vmul.f32 %v410, %v423
      %v430 = vadd.f32 %v391, %v427
      %v431 = vadd.f32 %v392, %v428
      %v432 = vadd.f32 %v393, %v429
      %v433 = vld [vmem:[%s0 + $0x4] sm:$0xf]
      %435 = vset.pattern.permute.xlu0 5
      %436 = vperm.xlu0 %435, %v433
      %v437 = vpop.permute.xlu0 %436
      %v439 = vmul.f32 %v437, %v421
      %v440 = vmul.f32 %v437, %v422
      %v441 = vmul.f32 %v437, %v423
      %v442 = vadd.f32 %v403, %v439
      %v443 = vadd.f32 %v404, %v440
      %v444 = vadd.f32 %v405, %v441
      %v445 = vld [vmem:[%s0] sm:$0xf]
      %447 = vset.pattern.permute.xlu0 6
      %448 = vperm.xlu0 %447, %v445
      %v449 = vpop.permute.xlu0 %448
      %451 = vrot.lane.b32.xlu0 %v225, 92
      %v452 = vpop.permute.xlu0 %451
      %453 = vrot.lane.b32.xlu0 %v235, 92
      %v454 = vpop.permute.xlu0 %453
      %455 = vrot.lane.b32.xlu0 %v226, 92
      %v456 = vpop.permute.xlu0 %455
      %457 = vrot.lane.b32.xlu0 %v255, 92
      %v458 = vpop.permute.xlu0 %457
      %vm459 = vcmask 752640
      %v460 = vsel %vm459, %v452, %v454
      %v461 = vsel %vm459, %v454, %v456
      %v462 = vsel %vm459, %v456, %v458
      %v466 = vmul.f32 %v449, %v460
      %v467 = vmul.f32 %v449, %v461
      %v468 = vmul.f32 %v449, %v462
      %v469 = vadd.f32 %v430, %v466
      %v470 = vadd.f32 %v431, %v467
      %v471 = vadd.f32 %v432, %v468
      %v472 = vld [vmem:[%s0 + $0x4] sm:$0xf]
      %474 = vset.pattern.permute.xlu0 6
      %475 = vperm.xlu0 %474, %v472
      %v476 = vpop.permute.xlu0 %475
      %v478 = vmul.f32 %v476, %v460
      %v479 = vmul.f32 %v476, %v461
      %v480 = vmul.f32 %v476, %v462
      %v481 = vadd.f32 %v442, %v478
      %v482 = vadd.f32 %v443, %v479
      %v483 = vadd.f32 %v444, %v480
      %v484 = vld [vmem:[%s0] sm:$0xf]
      %486 = vset.pattern.permute.xlu0 7
      %487 = vperm.xlu0 %486, %v484
      %v488 = vpop.permute.xlu0 %487
      %490 = vrot.lane.b32.xlu0 %v225, 91
      %v491 = vpop.permute.xlu0 %490
      %492 = vrot.lane.b32.xlu0 %v235, 91
      %v493 = vpop.permute.xlu0 %492
      %494 = vrot.lane.b32.xlu0 %v226, 91
      %v495 = vpop.permute.xlu0 %494
      %496 = vrot.lane.b32.xlu0 %v255, 91
      %v497 = vpop.permute.xlu0 %496
      %vm498 = vcmask 744448
      %v499 = vsel %vm498, %v491, %v493
      %v500 = vsel %vm498, %v493, %v495
      %v501 = vsel %vm498, %v495, %v497
      %v505 = vmul.f32 %v488, %v499
      %v506 = vmul.f32 %v488, %v500
      %v507 = vmul.f32 %v488, %v501
      %v508 = vadd.f32 %v469, %v505
      %v509 = vadd.f32 %v470, %v506
      %v510 = vadd.f32 %v471, %v507
      %v511 = vld [vmem:[%s0 + $0x4] sm:$0xf]
      %513 = vset.pattern.permute.xlu0 7
      %514 = vperm.xlu0 %513, %v511
      %v515 = vpop.permute.xlu0 %514
      %v517 = vmul.f32 %v515, %v499
      %v518 = vmul.f32 %v515, %v500
      %v519 = vmul.f32 %v515, %v501
      %v520 = vadd.f32 %v481, %v517
      %v521 = vadd.f32 %v482, %v518
      %v522 = vadd.f32 %v483, %v519
      %v523 = vld [vmem:[%s0] sm:$0xf]
      %525 = vset.pattern.permute.xlu0 8
      %526 = vperm.xlu0 %525, %v523
      %v527 = vpop.permute.xlu0 %526
      %529 = vrot.lane.b32.xlu0 %v225, 90
      %v530 = vpop.permute.xlu0 %529
      %531 = vrot.lane.b32.xlu0 %v235, 90
      %v532 = vpop.permute.xlu0 %531
      %533 = vrot.lane.b32.xlu0 %v226, 90
      %v534 = vpop.permute.xlu0 %533
      %535 = vrot.lane.b32.xlu0 %v255, 90
      %v536 = vpop.permute.xlu0 %535
      %vm537 = vcmask 736256
      %v538 = vsel %vm537, %v530, %v532
      %v539 = vsel %vm537, %v532, %v534
      %v540 = vsel %vm537, %v534, %v536
      %v544 = vmul.f32 %v527, %v538
      %v545 = vmul.f32 %v527, %v539
      %v546 = vmul.f32 %v527, %v540
      %v547 = vadd.f32 %v508, %v544
      %v548 = vadd.f32 %v509, %v545
      %v549 = vadd.f32 %v510, %v546
      %v550 = vld [vmem:[%s0 + $0x4] sm:$0xf]
      %552 = vset.pattern.permute.xlu0 8
      %553 = vperm.xlu0 %552, %v550
      %v554 = vpop.permute.xlu0 %553
      %v556 = vmul.f32 %v554, %v538
      %v557 = vmul.f32 %v554, %v539
      %v558 = vmul.f32 %v554, %v540
      %v559 = vadd.f32 %v520, %v556
      %v560 = vadd.f32 %v521, %v557
      %v561 = vadd.f32 %v522, %v558
      %v562 = vld [vmem:[%s1] sm:$0xf]
      %564 = vset.pattern.permute.xlu0 0
      %565 = vperm.xlu0 %564, %v562
      %v566 = vpop.permute.xlu0 %565
      %v568 = vadd.f32 %v547, %v566
      %v569 = vadd.f32 %v548, %v566
      %v570 = vadd.f32 %v549, %v566
      %v571 = vsub.f32 0.0, %v568
      %v572 = vsub.f32 0.0, %v569
      %v573 = vsub.f32 0.0, %v570
      %v574 = vmul.f32 %v571, 1.442695
      %v575 = vpow.pop %v574
      %v576 = vmul.f32 %v572, 1.442695
      %v577 = vpow.pop %v576
      %v578 = vmul.f32 %v573, 1.442695
      %v579 = vpow.pop %v578
      %v580 = vadd.f32 %v575, 1.0
      %v581 = vadd.f32 %v577, 1.0
      %v582 = vadd.f32 %v579, 1.0
      %v583 = vrcp.pop %v580
      %v584 = vmul.f32 1.0, %v583
      %v585 = vrcp.pop %v581
      %v586 = vmul.f32 1.0, %v585
      %v587 = vrcp.pop %v582
      %v588 = vmul.f32 1.0, %v587
      %v589 = vmul.f32 %v568, %v584
      %v590 = vmul.f32 %v569, %v586
      %v591 = vmul.f32 %v570, %v588
      %592 = vst [vmem:[#allocation2] sm:$0xf] %v589
      %593 = vst [vmem:[#allocation2 + $0x8] sm:$0xf] %v590
      %594 = vst [vmem:[#allocation2 + $0x10] sm:$0xf] %v591
      %v595 = vld [vmem:[%s1 + $0x4] sm:$0xf]
      %597 = vset.pattern.permute.xlu0 0
      %598 = vperm.xlu0 %597, %v595
      %v599 = vpop.permute.xlu0 %598
      %v601 = vadd.f32 %v559, %v599
      %v602 = vadd.f32 %v560, %v599
      %v603 = vadd.f32 %v561, %v599
      %v604 = vsub.f32 0.0, %v601
      %v605 = vsub.f32 0.0, %v602
      %v606 = vsub.f32 0.0, %v603
      %v607 = vmul.f32 %v604, 1.442695
      %v608 = vpow.pop %v607
      %v609 = vmul.f32 %v605, 1.442695
      %v610 = vpow.pop %v609
      %v611 = vmul.f32 %v606, 1.442695
      %v612 = vpow.pop %v611
      %v613 = vadd.f32 %v608, 1.0
      %v614 = vadd.f32 %v610, 1.0
      %v615 = vadd.f32 %v612, 1.0
      %v616 = vrcp.pop %v613
      %v617 = vmul.f32 1.0, %v616
      %v618 = vrcp.pop %v614
      %v619 = vmul.f32 1.0, %v618
      %v620 = vrcp.pop %v615
      %v621 = vmul.f32 1.0, %v620
      %v622 = vmul.f32 %v601, %v617
      %v623 = vmul.f32 %v602, %v619
      %v624 = vmul.f32 %v603, %v621
      %v628 = vrot.slane %v622, 4
      %v629 = vrot.slane %v623, 4
      %v630 = vrot.slane %v624, 4
      %634 = vst [vmem:[#allocation2] sm:$0xf0] %v628
      %635 = vst [vmem:[#allocation2 + $0x8] sm:$0xf0] %v629
      %636 = vst [vmem:[#allocation2 + $0x10] sm:$0xf0] %v630
      %v637 = vld [vmem:[%s2] sm:$0xff]
      %v638 = vld [vmem:[#allocation2] sm:$0xff]
      %v639 = vld [vmem:[#allocation2 + $0x8] sm:$0xff]
      %v640 = vld [vmem:[#allocation2 + $0x10] sm:$0xff]
      %v641 = vld [vmem:[%s3] sm:$0xff]
      %643 = vset.pattern.permute.xlu0 0
      %644 = vperm.xlu0 %643, %v641
      %v645 = vpop.permute.xlu0 %644
      %vm647 = vcmask 64512
      %v649 = vsel %vm647, %v637, 0
      %651 = vmatprep.subr.mxu0 %v639
      %652 = vmatpush1.msra.mxu0 %v638
      %653 = vmatprep.subr.mxu0 0.0
      %654 = vmatpush1.msra.mxu0 0.0
      %655 = vmatprep.subr.mxu0 0.0
      %656 = vmatpush1.msra.mxu0 0.0
      %657 = vmatprep.subr.mxu0 0.0
      %658 = vmatpush1.msra.mxu0 0.0
      %659 = vmatprep.subr.mxu0 0.0
      %660 = vmatpush1.msra.mxu0 0.0
      %661 = vmatprep.subr.mxu0 0.0
      %662 = vmatpush1.msra.mxu0 0.0
      %663 = vmatprep.subr.mxu0 0.0
      %664 = vmatpush1.msra.mxu0 0.0
      %665 = vmatprep.subr.mxu0 0.0
      %666 = vmatpush1.msra.mxu0 0.0
      %667 = vmatprep.subr.mxu0 0.0
      %668 = vmatpush1.msra.mxu0 0.0
      %669 = vmatprep.subr.mxu0 0.0
      %670 = vmatpush1.msra.mxu0 0.0
      %671 = vmatprep.subr.mxu0 0.0
      %672 = vmatpush1.msra.mxu0 0.0
      %673 = vmatprep.subr.mxu0 0.0
      %674 = vmatpush1.msra.mxu0 0.0
      %675 = vmatprep.subr.mxu0 0.0
      %676 = vmatpush1.msra.mxu0 0.0
      %677 = vmatprep.subr.mxu0 0.0
      %678 = vmatpush1.msra.mxu0 0.0
      %679 = vmatprep.subr.mxu0 0.0
      %680 = vmatpush1.msra.mxu0 0.0
      %681 = vmatprep.subr.mxu0 0.0
      %682 = vmatpush1.msra.mxu0 0.0
      %683 = vmatprep.subr.mxu0 0.0
      %684 = vmatpush1.msra.mxu0 0.0
      %685 = vmatprep.subr.mxu0 0.0
      %686 = vmatpush1.msra.mxu0 0.0
      %687 = vmatprep.subr.mxu0 0.0
      %688 = vmatpush1.msra.mxu0 0.0
      %689 = vmatprep.subr.mxu0 0.0
      %690 = vmatpush1.msra.mxu0 0.0
      %691 = vmatprep.subr.mxu0 0.0
      %692 = vmatpush1.msra.mxu0 0.0
      %693 = vmatprep.subr.mxu0 0.0
      %694 = vmatpush1.msra.mxu0 0.0
      %695 = vmatprep.subr.mxu0 0.0
      %696 = vmatpush1.msra.mxu0 0.0
      %697 = vmatprep.subr.mxu0 0.0
      %698 = vmatpush1.msra.mxu0 0.0
      %699 = vmatprep.subr.mxu0 0.0
      %700 = vmatpush1.msra.mxu0 0.0
      %701 = vmatprep.subr.mxu0 0.0
      %702 = vmatpush1.msra.mxu0 0.0
      %703 = vmatprep.subr.mxu0 0.0
      %704 = vmatpush1.msra.mxu0 0.0
      %705 = vmatprep.subr.mxu0 0.0
      %706 = vmatpush1.msra.mxu0 0.0
      %707 = vmatprep.subr.mxu0 0.0
      %708 = vmatpush1.msra.mxu0 0.0
      %709 = vmatprep.subr.mxu0 0.0
      %710 = vmatpush1.msra.mxu0 0.0
      %711 = vmatprep.subr.mxu0 0.0
      %712 = vmatpush1.msra.mxu0 0.0
      %713 = vmatprep.subr.mxu0 0.0
      %714 = vmatpush1.msra.mxu0 0.0
      %715 = vmatprep.mubr.f32.mxu0 0.0
      %716 = vmatmul.mubr.f32.gmra.mrb[0].mxu0 %v649
      %v717 = vpop.f32.mrb[0].mxu0
      %v718 = vadd.f32 %v645, %v717
      %v719 = vpop.f32.mrb[0].mxu0
      %v720 = vadd.f32 %v645, %v719
      %721 = vdwg.mxu0
      %722 = vmatprep.subr.mxu0 0.0
      %723 = vmatpush1.msra.mxu0 %v640
      %724 = vmatprep.subr.mxu0 0.0
      %725 = vmatpush1.msra.mxu0 0.0
      %726 = vmatprep.subr.mxu0 0.0
      %727 = vmatpush1.msra.mxu0 0.0
      %728 = vmatprep.subr.mxu0 0.0
      %729 = vmatpush1.msra.mxu0 0.0
      %730 = vmatprep.subr.mxu0 0.0
      %731 = vmatpush1.msra.mxu0 0.0
      %732 = vmatprep.subr.mxu0 0.0
      %733 = vmatpush1.msra.mxu0 0.0
      %734 = vmatprep.subr.mxu0 0.0
      %735 = vmatpush1.msra.mxu0 0.0
      %736 = vmatprep.subr.mxu0 0.0
      %737 = vmatpush1.msra.mxu0 0.0
      %738 = vmatprep.subr.mxu0 0.0
      %739 = vmatpush1.msra.mxu0 0.0
      %740 = vmatprep.subr.mxu0 0.0
      %741 = vmatpush1.msra.mxu0 0.0
      %742 = vmatprep.subr.mxu0 0.0
      %743 = vmatpush1.msra.mxu0 0.0
      %744 = vmatprep.subr.mxu0 0.0
      %745 = vmatpush1.msra.mxu0 0.0
      %746 = vmatprep.subr.mxu0 0.0
      %747 = vmatpush1.msra.mxu0 0.0
      %748 = vmatprep.subr.mxu0 0.0
      %749 = vmatpush1.msra.mxu0 0.0
      %750 = vmatprep.subr.mxu0 0.0
      %751 = vmatpush1.msra.mxu0 0.0
      %752 = vmatprep.subr.mxu0 0.0
      %753 = vmatpush1.msra.mxu0 0.0
      %754 = vmatprep.subr.mxu0 0.0
      %755 = vmatpush1.msra.mxu0 0.0
      %756 = vmatprep.subr.mxu0 0.0
      %757 = vmatpush1.msra.mxu0 0.0
      %758 = vmatprep.subr.mxu0 0.0
      %759 = vmatpush1.msra.mxu0 0.0
      %760 = vmatprep.subr.mxu0 0.0
      %761 = vmatpush1.msra.mxu0 0.0
      %762 = vmatprep.subr.mxu0 0.0
      %763 = vmatpush1.msra.mxu0 0.0
      %764 = vmatprep.subr.mxu0 0.0
      %765 = vmatpush1.msra.mxu0 0.0
      %766 = vmatprep.subr.mxu0 0.0
      %767 = vmatpush1.msra.mxu0 0.0
      %768 = vmatprep.subr.mxu0 0.0
      %769 = vmatpush1.msra.mxu0 0.0
      %770 = vmatprep.subr.mxu0 0.0
      %771 = vmatpush1.msra.mxu0 0.0
      %772 = vmatprep.subr.mxu0 0.0
      %773 = vmatpush1.msra.mxu0 0.0
      %774 = vmatprep.subr.mxu0 0.0
      %775 = vmatpush1.msra.mxu0 0.0
      %776 = vmatprep.subr.mxu0 0.0
      %777 = vmatpush1.msra.mxu0 0.0
      %778 = vmatprep.subr.mxu0 0.0
      %779 = vmatpush1.msra.mxu0 0.0
      %780 = vmatprep.subr.mxu0 0.0
      %781 = vmatpush1.msra.mxu0 0.0
      %782 = vmatprep.subr.mxu0 0.0
      %783 = vmatpush1.msra.mxu0 0.0
      %784 = vmatprep.subr.mxu0 0.0
      %785 = vmatpush1.msra.mxu0 0.0
      %786 = vmatprep.mubr.f32.mxu0 0.0
      %787 = vmatmul.mubr.f32.gmra.mrb[0].mxu0 %v649
      %v788 = vpop.f32.mrb[0].mxu0
      %v789 = vadd.f32 %v645, %v788
      %v790 = vpop.f32.mrb[0].mxu0
      %791 = vdwg.mxu0
      %v792 = vsub.f32 0.0, %v718
      %v793 = vsub.f32 0.0, %v720
      %v794 = vsub.f32 0.0, %v789
      %v795 = vmul.f32 %v792, 1.442695
      %v796 = vpow.pop %v795
      %v797 = vmul.f32 %v793, 1.442695
      %v798 = vpow.pop %v797
      %v799 = vmul.f32 %v794, 1.442695
      %v800 = vpow.pop %v799
      %v801 = vadd.f32 %v796, 1.0
      %v802 = vadd.f32 %v798, 1.0
      %v803 = vadd.f32 %v800, 1.0
      %v804 = vrcp.pop %v801
      %v805 = vmul.f32 1.0, %v804
      %v806 = vrcp.pop %v802
      %v807 = vmul.f32 1.0, %v806
      %v808 = vrcp.pop %v803
      %v809 = vmul.f32 1.0, %v808
      %v810 = vmul.f32 %v718, %v805
      %v811 = vmul.f32 %v720, %v807
      %v812 = vmul.f32 %v789, %v809
      %813 = vst [vmem:[%s224] sm:$0xff] %v810
      %814 = vst [vmem:[%s224 + $0x8] sm:$0xff] %v811
      %815 = vst [vmem:[%s224 + $0x10] sm:$0xff] %v812
      %p816 = scmp.lt.s32.totalorder %s16, 1
      %s817 = scalar_select %p816, %s16, 1
      %s818 = smul.addr %s817, 3
      %s819 = smul.addr %s818, 8
      %s820 = scalar_lea.vmem %s5, %s819
      // Predicated region
      $region41: #{conv_bn_act_forward.1} parent=39 // pred_check
        %p821 = pneg %p144
      $region42: #{conv_bn_act_forward.1} parent=39 // pred_check_branch
        %823 = sbr.rel (%p821) target = $region44
      $region43: #{conv_bn_act_forward.1} parent=39 // pred_region
        _
      $region44: #{conv_bn_act_forward.1} parent=39 // pred_fallthru
        _
    $region40: #{conv_bn_act_forward.1} parent=5 // pred_fallthru
      _
    %p824 = scmp.le.s32.totalorder 2, %s11
    // Predicated region
    $region45: #{conv_bn_act_forward.1} parent=5 // pred_check
      %p825 = pneg %p824
    $region46: #{conv_bn_act_forward.1} parent=5 // pred_check_branch
      %827 = sbr.rel (%p825) target = $region48
    $region47: #{conv_bn_act_forward.1} parent=5 // pred_region
      %s828 = ssub.s32 %s11, 2
      // Predicated region
      $region49: #{conv_bn_act_forward.1} parent=47 // pred_check
        %p829 = pneg %p150
      $region50: #{conv_bn_act_forward.1} parent=47 // pred_check_branch
        %831 = sbr.rel (%p829) target = $region52
      $region51: #{conv_bn_act_forward.1} parent=47 // pred_region
        %p832 = scmp.lt.s32.totalorder %s17, 1
        %s833 = scalar_select %p832, %s17, 1
        %s834 = smul.addr %s833, 3
        %s835 = smul.addr %s834, 8
        %s836 = scalar_lea.vmem %s5, %s835
      $region52: #{conv_bn_act_forward.1} parent=47 // pred_fallthru
        _
    $region48: #{conv_bn_act_forward.1} parent=5 // pred_fallthru
      _
  $region6: #{conv_bn_act_forward.1} parent=0 // loop_footer
    %s15 = sadd.s32 1, %s11
  $region7: #{conv_bn_act_forward.1} parent=0 // loop_footer_branch
    %10 = sbr.rel target = $region3
  $region8: #{conv_bn_act_forward.1} parent=0 // loop_exit
    _

</llo_original>
